<compile_context>
chip_gen: v5e
topology: v5e:2x2
jax: 0.10.0
libtpu: 0.0.40
codegen_flags: <defaults>
</compile_context>

<pallas_src>
import jax
import jax.numpy as jnp
from jax.experimental import pallas as pl
from jax.experimental.pallas import tpu as pltpu


def _vrelu_kernel(z_ref, o_ref):
    # relu(z) + relu(-z) == |z| exactly (NaN propagation and -0.0 included).
    o_ref[...] = jnp.abs(z_ref[...])


def _round_up(x, m):
    return (x + m - 1) // m * m


def vrelu(z):
    """VReLU forward. z: NCHW (or any shape); returns same shape/dtype."""
    orig_shape = z.shape
    orig_dtype = z.dtype
    total = int(z.size)

    LANE = 128
    SUBLANE = 8
    itemsize = jnp.dtype(orig_dtype).itemsize

    # ~1 MiB per block (2048 rows x 128 lanes for f32): big enough to amortize
    # per-step overhead, small enough that double-buffered in+out (4x block)
    # stays well inside every generation's default scoped VMEM.
    target_rows = max(SUBLANE, (1 << 20) // (LANE * itemsize))

    rows = -(-total // LANE)                  # ceil-div to lane-dense rows
    rows = _round_up(rows, SUBLANE)           # sublane-aligned row count
    tr = min(target_rows, rows)               # block rows (multiple of 8)
    rows_padded = _round_up(rows, tr)         # grid divides evenly -> pipelined
    padded_total = rows_padded * LANE
    pad = padded_total - total

    flat = z.reshape(-1)
    if pad:
        # Only taken when the element count isn't already tile aligned.
        flat = jnp.concatenate([flat, jnp.zeros((pad,), dtype=orig_dtype)])
    x2d = flat.reshape(rows_padded, LANE)

    grid = (rows_padded // tr,)

    out2d = pl.pallas_call(
        _vrelu_kernel,
        out_shape=jax.ShapeDtypeStruct((rows_padded, LANE), orig_dtype),
        grid_spec=pltpu.PrefetchScalarGridSpec(
            num_scalar_prefetch=0,
            grid=grid,
            in_specs=[pl.BlockSpec((tr, LANE), lambda i: (i, 0))],
            out_specs=pl.BlockSpec((tr, LANE), lambda i: (i, 0)),
        ),
        compiler_params=pltpu.CompilerParams(
            dimension_semantics=("parallel",),
        ),
        # TODO(synk): consider input_output_aliases={0: 0} when callers donate z;
        # omitted here because the test reuses x after the call.
    )(x2d)

    out_flat = out2d.reshape(-1)
    if pad:
        out_flat = out_flat[:total]
    return out_flat.reshape(orig_shape)


if __name__ == "__main__":
    key = jax.random.PRNGKey(0)

    # NCHW input consistent with a conv-net activation: batch=2, C=4, H=W=16
    x = jax.random.normal(key, (2, 4, 16, 16), dtype=jnp.float32)
    y = vrelu(x)
    jax.block_until_ready(y)
    ref = jnp.maximum(x, 0.0) + jnp.maximum(-x, 0.0)
    assert y.shape == x.shape and y.dtype == x.dtype
    assert jnp.allclose(y, ref), "mismatch vs reference (aligned shape)"

    # Ragged shape to exercise the (rarely taken) padding path.
    x2 = jax.random.normal(jax.random.PRNGKey(1), (3, 5, 7, 9), dtype=jnp.float32)
    y2 = vrelu(x2)
    jax.block_until_ready(y2)
    ref2 = jnp.maximum(x2, 0.0) + jnp.maximum(-x2, 0.0)
    assert y2.shape == x2.shape and y2.dtype == x2.dtype
    assert jnp.allclose(y2, ref2), "mismatch vs reference (ragged shape)"

    print("KERNEL_OK")
</pallas_src>

<mosaic_0001>
module attributes {stable_mosaic.version = 11 : i64} {
  func.func @_vrelu_kernel(%arg0: i32, %arg1: memref<16x128xf32, #tpu.memory_space<vmem>>, %arg2: memref<16x128xf32, #tpu.memory_space<vmem>>) attributes {dimension_semantics = [#tpu.dimension_semantics<parallel>], iteration_bounds = array<i64: 1>, scalar_prefetch = 0 : i64, scratch_operands = 0 : i64, tpu.core_type = #tpu.core_type<tc>, window_params = [{transform_indices = @transform_0, window_bounds = array<i64: 16, 128>}, {transform_indices = @transform_1, window_bounds = array<i64: 16, 128>}]} {
    %c0 = arith.constant 0 : index
    %c0_0 = arith.constant 0 : index
    %0 = vector.load %arg1[%c0, %c0_0] : memref<16x128xf32, #tpu.memory_space<vmem>>, vector<16x128xf32>
    %1 = math.absf %0 : vector<16x128xf32>
    %c0_1 = arith.constant 0 : index
    %c0_2 = arith.constant 0 : index
    %2 = vector.load %arg2[%c0_1, %c0_2] : memref<16x128xf32, #tpu.memory_space<vmem>>, vector<16x128xf32>
    tpu.vector_store %arg2[%c0_1, %c0_2], %1 {strides = array<i32>} : memref<16x128xf32, #tpu.memory_space<vmem>>, vector<16x128xf32>,
    return
  }
  func.func @transform_0(%arg0: i32) -> (i32, i32) {
    %c0_i32 = arith.constant 0 : i32
    %c0_i32_0 = arith.constant 0 : i32
    return %arg0, %c0_i32 : i32, i32
  }
  func.func @transform_1(%arg0: i32) -> (i32, i32) {
    %c0_i32 = arith.constant 0 : i32
    %c0_i32_0 = arith.constant 0 : i32
    return %arg0, %c0_i32 : i32, i32
  }
}

</mosaic_0001>

<llo_original>
// kernel: tpu_custom_call.1
$region0: #{tpu_custom_call.1}
  #allocation0 [shape = 'u32[]', space=smem, size = 0x4, offset = 0x4, fixed_abs, tag = 'smem constant byte address 0x4 - core index']
  #allocation1 [shape = 'u32[72,128]{1,0:T(1,128)}', space=vmem, size = 0x9000, scoped, tag = 'internal scratch']
  %s0 = inlined_call_operand.hbm [shape: f32[16,128], index: 0, kind: input, shape index: {}]
  %s1 = inlined_call_operand.hbm [shape: f32[16,128], index: 1, kind: output, shape index: {}]
  %s2 = sld [smem:[#allocation0]]
  $region18: #{tpu_custom_call.1} parent=0
    _
  %s4 = ssub.s32 1, %s2
  %s5 = scalar_select 0, %s4, %s2
  $region1: #{tpu_custom_call.1} parent=0
    #allocation2 [shape = 'u8[8192]{0}', space=vmem, size = 0x2000, scoped, tag = 'input window, operand 0, single buffered']
    #allocation3 [shape = 's32[1]{0}', space=sflag, size = 0x4, scoped, tag = 'scoped memory for tpu_custom_call.1']
    #allocation4 [shape = 's32[1]{0}', space=sflag, size = 0x4, scoped, tag = 'scoped memory for tpu_custom_call.1']
    #allocation5 [shape = 'u8[8192]{0}', space=vmem, size = 0x2000, scoped, tag = 'output window, operand 0, single buffered']
    %6 = vsyncpa [#allocation3], 0
    %7 = vsyncpa [#allocation4], 0
    // Predicated region
    $region2: #{tpu_custom_call.1} parent=1 // pred_check
      _
    $region3: #{tpu_custom_call.1} parent=1 // pred_check_branch
      %9 = sbr.rel (0) target = $region5
    $region4: #{tpu_custom_call.1} parent=1 // pred_region
      %11 = vsyncadd [#allocation3], 0
      %s12 = sshll.u32 %s0, 4
      %s13 = int_to_ptr.hbm [resolvable:$true] %s12
      %s14 = sshll.u32 [#allocation2], 4
      %s15 = int_to_ptr.vmem [resolvable:$true] %s14
      %20 = dma.hbm_to_vmem [thread:$0]  %s13, 256, %s15, [#allocation3], 128, 128, 8
    $region5: #{tpu_custom_call.1} parent=1 // pred_fallthru
      _
    // Predicated region
    $region6: #{tpu_custom_call.1} parent=1 // pred_check
      _
    $region7: #{tpu_custom_call.1} parent=1 // pred_check_branch
      %22 = sbr.rel (0) target = $region9
    $region8: #{tpu_custom_call.1} parent=1 // pred_region
      %24 = dma.done [#allocation3], 256
    $region9: #{tpu_custom_call.1} parent=1 // pred_fallthru
      _
    %v25 = vld [vmem:[#allocation2] sm:$0xff]
    %v26 = vld [vmem:[#allocation2 + $0x8] sm:$0xff]
    %v27 = vand.u32 2147483647, %v25
    %v28 = vand.u32 2147483647, %v26
    %29 = vst [vmem:[#allocation5] sm:$0xff] %v27
    %30 = vst [vmem:[#allocation5 + $0x8] sm:$0xff] %v28
    // Predicated region
    $region10: #{tpu_custom_call.1} parent=1 // pred_check
      _
    $region11: #{tpu_custom_call.1} parent=1 // pred_check_branch
      %32 = sbr.rel (0) target = $region13
    $region12: #{tpu_custom_call.1} parent=1 // pred_region
      %34 = vsyncadd [#allocation4], 0
      %s35 = sshll.u32 [#allocation5], 4
      %s36 = int_to_ptr.vmem [resolvable:$true] %s35
      %s37 = sshll.u32 %s1, 4
      %s38 = int_to_ptr.hbm [resolvable:$true] %s37
      %43 = dma.vmem_to_hbm [thread:$0]  %s36, 256, %s38, [#allocation4], 128, 128, 8
    $region13: #{tpu_custom_call.1} parent=1 // pred_fallthru
      _
    // Predicated region
    $region14: #{tpu_custom_call.1} parent=1 // pred_check
      _
    $region15: #{tpu_custom_call.1} parent=1 // pred_check_branch
      %45 = sbr.rel (0) target = $region17
    $region16: #{tpu_custom_call.1} parent=1 // pred_region
      %47 = dma.done [#allocation4], 256
    $region17: #{tpu_custom_call.1} parent=1 // pred_fallthru
      _
    %48 = vsyncpa [#allocation3], 1
    %49 = vsyncpa [#allocation4], 1

</llo_original>
